<compile_context>
chip_gen: v6e
topology: v6e:2x2x1
jax: 0.10.0
libtpu: 0.0.40
codegen_flags: <defaults>
</compile_context>

<pallas_src>
import jax
import jax.numpy as jnp
from jax import lax
from jax.experimental import pallas as pl
from jax.experimental.pallas import tpu as pltpu

EPS = 1e-5  # BatchNorm2d default eps


def _round_up(x, m):
    return (x + m - 1) // m * m


def _full_spec(shape):
    # Whole-array block (exempt from the (8,128) divisibility rule).
    return pl.BlockSpec(shape, lambda i, _s=shape: tuple(0 for _ in _s))


def _model_kernel(lhs_ref, w1_ref, gamma_ref, beta_ref, w2_ref,
                  conv_o, pool_o, bn_o, fc_o):
    """Fused conv1 (single im2col matmul) + maxpool + batchnorm + fc2."""
    # conv1: one MXU matmul; rows = 4 pool-quadrants x (n, ph, pw) pixels.
    c = jnp.dot(lhs_ref[...], w1_ref[...],
                preferred_element_type=jnp.float32)            # (4M, Cp) f32
    conv_o[...] = c

    # pool1: 2x2 max pool == elementwise max over the 4 quadrant row-blocks.
    m = pool_o.shape[0]
    pool = jnp.maximum(jnp.maximum(c[0 * m:1 * m], c[1 * m:2 * m]),
                       jnp.maximum(c[2 * m:3 * m], c[3 * m:4 * m]))
    pool_o[...] = pool

    # bn1: one-pass per-channel batch stats (biased var = E[x^2] - E[x]^2).
    inv_m = 1.0 / m
    s1 = jnp.sum(pool, axis=0, keepdims=True)
    s2 = jnp.sum(pool * pool, axis=0, keepdims=True)
    mean = s1 * inv_m
    var = jnp.maximum(s2 * inv_m - mean * mean, 0.0)
    bn = (pool - mean) * lax.rsqrt(var + EPS) * gamma_ref[...] + beta_ref[...]
    bn_o[...] = bn

    # fc2: 1x1 conv == channel matmul (bf16 operands, f32 accumulate),
    # lane-dense output (num_classes padded to 128).
    fc_o[...] = jnp.dot(bn.astype(w2_ref.dtype), w2_ref[...],
                        preferred_element_type=jnp.float32)


@jax.jit
def model_forward(x_nchw, params):
    N, Cin, H, W = x_nchw.shape
    KH = KW = 5
    OH, OW = H - KH + 1, W - KW + 1          # conv1 spatial (VALID, stride 1)
    if OH % 2 or OW % 2:
        # TODO(synk): odd conv1 extents (max_pool2d floor) need an extra
        # row/col path; not needed for the shapes this model is used with.
        raise NotImplementedError("conv1 output spatial dims must be even")
    PH, PW = OH // 2, OW // 2
    Cout = params["w1"].shape[0]
    num_classes = params["w2"].shape[0]
    K = Cin * KH * KW
    Kp = _round_up(K, 128)                   # pad contraction dim -> full lanes
    Cp = _round_up(Cout, 128)                # pad channel dim -> dense stores
    Np = _round_up(num_classes, 128)         # pad fc lanes -> dense stores
    M = N * PH * PW

    # ---- JAX glue (layout plumbing only): bf16 im2col, quadrant-major rows --
    x = jnp.transpose(x_nchw, (0, 2, 3, 1)).astype(jnp.bfloat16)   # NHWC bf16
    cols = [x[:, kh:kh + OH, kw:kw + OW, :]
            for kh in range(KH) for kw in range(KW)]
    patches = jnp.stack(cols, axis=-1)                  # (N,OH,OW,Cin,KH*KW)
    patches = patches.reshape(N, OH, OW, K)             # k = c*25 + kh*5 + kw
    quads = jnp.stack([patches[:, dy::2, dx::2, :]
                       for dy in (0, 1) for dx in (0, 1)], axis=0)  # (4,N,PH,PW,K)
    lhs = quads.reshape(4 * M, K)
    lhs = jnp.pad(lhs, ((0, 0), (0, Kp - K)))           # zero-pad K (free)

    w1 = params["w1"].reshape(Cout, K).T.astype(jnp.bfloat16)       # (K, Cout)
    w1 = jnp.pad(w1, ((0, Kp - K), (0, Cp - Cout)))                 # (Kp, Cp)
    w2 = params["w2"].reshape(num_classes, Cout).T.astype(jnp.bfloat16)
    w2 = jnp.pad(w2, ((0, Cp - Cout), (0, Np - num_classes)))       # (Cp, Np)
    gamma = jnp.pad(params["gamma"].astype(jnp.float32),
                    (0, Cp - Cout)).reshape(1, Cp)
    beta = jnp.pad(params["beta"].astype(jnp.float32),
                   (0, Cp - Cout)).reshape(1, Cp)

    # ---- Pallas call: all hot-path compute in one fused kernel ----
    conv_f, pool_f, bn_f, fc_f = pl.pallas_call(
        _model_kernel,
        out_shape=(jax.ShapeDtypeStruct((4 * M, Cp), jnp.float32),   # conv1
                   jax.ShapeDtypeStruct((M, Cp), jnp.float32),       # pool1
                   jax.ShapeDtypeStruct((M, Cp), jnp.float32),       # bn1
                   jax.ShapeDtypeStruct((M, Np), jnp.float32)),      # fc2
        grid=(1,),
        in_specs=[_full_spec((4 * M, Kp)), _full_spec((Kp, Cp)),
                  _full_spec((1, Cp)), _full_spec((1, Cp)),
                  _full_spec((Cp, Np))],
        out_specs=(_full_spec((4 * M, Cp)), _full_spec((M, Cp)),
                   _full_spec((M, Cp)), _full_spec((M, Np))),
        compiler_params=pltpu.CompilerParams(
            dimension_semantics=("arbitrary",),
            vmem_limit_bytes=32 * 1024 * 1024),
    )(lhs, w1, gamma, beta, w2)

    # ---- JAX glue: reshape/transpose back to NCHW (no strided scatters) ----
    conv_q = conv_f[:, :Cout].reshape(2, 2, N, PH, PW, Cout)  # (dy,dx,n,ph,pw,c)
    conv_nhwc = jnp.transpose(conv_q, (2, 3, 0, 4, 1, 5)).reshape(N, OH, OW, Cout)
    conv1_out = jnp.transpose(conv_nhwc, (0, 3, 1, 2))              # (N,96,OH,OW)
    pool1_out = jnp.transpose(pool_f[:, :Cout].reshape(N, PH, PW, Cout),
                              (0, 3, 1, 2))
    bn1_out = jnp.transpose(bn_f[:, :Cout].reshape(N, PH, PW, Cout),
                            (0, 3, 1, 2))
    fc2_nchw = jnp.transpose(fc_f[:, :num_classes].reshape(N, PH, PW, num_classes),
                             (0, 3, 1, 2))
    fc2_out = fc2_nchw.reshape(-1, num_classes)          # == torch .view(-1, nc)

    return {
        "conv1": conv1_out,
        "pool1": pool1_out,
        "bn1": bn1_out,
        "fc2": fc2_out,
        "clf_output": {"class_scores": fc2_out},
    }


def _reference(x_nchw, params):
    """Pure-JAX reference for a sanity check (same semantics)."""
    conv = lax.conv_general_dilated(
        x_nchw, params["w1"], (1, 1), "VALID",
        dimension_numbers=("NCHW", "OIHW", "NCHW"))
    pool = lax.reduce_window(conv, -jnp.inf, lax.max,
                             (1, 1, 2, 2), (1, 1, 2, 2), "VALID")
    mean = jnp.mean(pool, axis=(0, 2, 3), keepdims=True)
    var = jnp.mean((pool - mean) ** 2, axis=(0, 2, 3), keepdims=True)
    bn = ((pool - mean) * lax.rsqrt(var + EPS)
          * params["gamma"].reshape(1, -1, 1, 1)
          + params["beta"].reshape(1, -1, 1, 1))
    fc = lax.conv_general_dilated(
        bn, params["w2"], (1, 1), "VALID",
        dimension_numbers=("NCHW", "OIHW", "NCHW"))
    return conv, pool, bn, fc.reshape(-1, params["w2"].shape[0])


if __name__ == "__main__":
    key = jax.random.PRNGKey(0)
    k_x, k_w1, k_w2, k_g, k_b = jax.random.split(key, 5)

    N, Cin, H, W = 2, 3, 16, 16
    Cout, num_classes = 96, 10

    x = jax.random.normal(k_x, (N, Cin, H, W), jnp.float32)
    params = {
        "w1": 0.1 * jax.random.normal(k_w1, (Cout, Cin, 5, 5), jnp.float32),
        "w2": 0.1 * jax.random.normal(k_w2, (num_classes, Cout, 1, 1), jnp.float32),
        "gamma": 1.0 + 0.1 * jax.random.normal(k_g, (Cout,), jnp.float32),
        "beta": 0.1 * jax.random.normal(k_b, (Cout,), jnp.float32),
    }

    out = model_forward(x, params)
    jax.block_until_ready(out)

    # numerical sanity check vs. pure-JAX reference (loose tol: bf16 MXU matmuls)
    ref_conv, ref_pool, ref_bn, ref_fc = _reference(x, params)
    for got, want in ((out["conv1"], ref_conv), (out["pool1"], ref_pool),
                      (out["bn1"], ref_bn), (out["fc2"], ref_fc)):
        assert got.shape == want.shape
        assert float(jnp.max(jnp.abs(got - want))) < 5e-2

    print("KERNEL_OK")
</pallas_src>

<mosaic_0001>
module attributes {stable_mosaic.version = 11 : i64} {
  func.func @_model_kernel(%arg0: i32, %arg1: memref<288x128xbf16, #tpu.memory_space<vmem>>, %arg2: memref<128x128xbf16, #tpu.memory_space<vmem>>, %arg3: memref<1x128xf32, #tpu.memory_space<vmem>>, %arg4: memref<1x128xf32, #tpu.memory_space<vmem>>, %arg5: memref<128x128xbf16, #tpu.memory_space<vmem>>, %arg6: memref<288x128xf32, #tpu.memory_space<vmem>>, %arg7: memref<72x128xf32, #tpu.memory_space<vmem>>, %arg8: memref<72x128xf32, #tpu.memory_space<vmem>>, %arg9: memref<72x128xf32, #tpu.memory_space<vmem>>) attributes {dimension_semantics = [#tpu.dimension_semantics<arbitrary>], iteration_bounds = array<i64: 1>, scalar_prefetch = 0 : i64, scratch_operands = 0 : i64, tpu.core_type = #tpu.core_type<tc>, window_params = [{pipeline_mode = #tpu.pipeline_mode<synchronous>, transform_indices = @transform_0, window_bounds = array<i64: 288, 128>}, {pipeline_mode = #tpu.pipeline_mode<synchronous>, transform_indices = @transform_1, window_bounds = array<i64: 128, 128>}, {pipeline_mode = #tpu.pipeline_mode<synchronous>, transform_indices = @transform_2, window_bounds = array<i64: 1, 128>}, {pipeline_mode = #tpu.pipeline_mode<synchronous>, transform_indices = @transform_3, window_bounds = array<i64: 1, 128>}, {pipeline_mode = #tpu.pipeline_mode<synchronous>, transform_indices = @transform_4, window_bounds = array<i64: 128, 128>}, {pipeline_mode = #tpu.pipeline_mode<synchronous>, transform_indices = @transform_5, window_bounds = array<i64: 288, 128>}, {pipeline_mode = #tpu.pipeline_mode<synchronous>, transform_indices = @transform_6, window_bounds = array<i64: 72, 128>}, {pipeline_mode = #tpu.pipeline_mode<synchronous>, transform_indices = @transform_7, window_bounds = array<i64: 72, 128>}, {pipeline_mode = #tpu.pipeline_mode<synchronous>, transform_indices = @transform_8, window_bounds = array<i64: 72, 128>}]} {
    %c0 = arith.constant 0 : index
    %c0_0 = arith.constant 0 : index
    %0 = vector.load %arg1[%c0, %c0_0] : memref<288x128xbf16, #tpu.memory_space<vmem>>, vector<288x128xbf16>
    %c0_1 = arith.constant 0 : index
    %c0_2 = arith.constant 0 : index
    %1 = vector.load %arg2[%c0_1, %c0_2] : memref<128x128xbf16, #tpu.memory_space<vmem>>, vector<128x128xbf16>
    %cst = arith.constant dense<0.000000e+00> : vector<288x128xf32>
    %2 = tpu.matmul %0, %1, %cst {dimension_numbers = #tpu.dot_dimension_numbers<[1], [0], [0], [1], [0, 0, 1, 1], [], []>} : vector<288x128xbf16>, vector<128x128xbf16>, vector<288x128xf32> -> vector<288x128xf32>
    %c0_3 = arith.constant 0 : index
    %c0_4 = arith.constant 0 : index
    %3 = vector.load %arg6[%c0_3, %c0_4] : memref<288x128xf32, #tpu.memory_space<vmem>>, vector<288x128xf32>
    tpu.vector_store %arg6[%c0_3, %c0_4], %2 {strides = array<i32>} : memref<288x128xf32, #tpu.memory_space<vmem>>, vector<288x128xf32>,
    %4 = vector.extract_strided_slice %2 {offsets = [0, 0], sizes = [72, 128], strides = [1, 1]} : vector<288x128xf32> to vector<72x128xf32>
    %5 = vector.extract_strided_slice %2 {offsets = [72, 0], sizes = [72, 128], strides = [1, 1]} : vector<288x128xf32> to vector<72x128xf32>
    %6 = arith.maximumf %4, %5 : vector<72x128xf32>
    %7 = vector.extract_strided_slice %2 {offsets = [144, 0], sizes = [72, 128], strides = [1, 1]} : vector<288x128xf32> to vector<72x128xf32>
    %8 = vector.extract_strided_slice %2 {offsets = [216, 0], sizes = [72, 128], strides = [1, 1]} : vector<288x128xf32> to vector<72x128xf32>
    %9 = arith.maximumf %7, %8 : vector<72x128xf32>
    %10 = arith.maximumf %6, %9 : vector<72x128xf32>
    %c0_5 = arith.constant 0 : index
    %c0_6 = arith.constant 0 : index
    %11 = vector.load %arg7[%c0_5, %c0_6] : memref<72x128xf32, #tpu.memory_space<vmem>>, vector<72x128xf32>
    tpu.vector_store %arg7[%c0_5, %c0_6], %10 {strides = array<i32>} : memref<72x128xf32, #tpu.memory_space<vmem>>, vector<72x128xf32>,
    %cst_7 = arith.constant dense<0.000000e+00> : vector<128xf32>
    %12 = vector.multi_reduction <add>, %10, %cst_7 [0] : vector<72x128xf32> to vector<128xf32>
    %13 = vector.shape_cast %12 : vector<128xf32> to vector<1x128xf32>
    %14 = arith.mulf %10, %10 : vector<72x128xf32>
    %cst_8 = arith.constant dense<0.000000e+00> : vector<128xf32>
    %15 = vector.multi_reduction <add>, %14, %cst_8 [0] : vector<72x128xf32> to vector<128xf32>
    %16 = vector.shape_cast %15 : vector<128xf32> to vector<1x128xf32>
    %cst_9 = arith.constant 0.013888889 : f32
    %17 = vector.broadcast %cst_9 : f32 to vector<1x128xf32>
    %18 = arith.mulf %13, %17 : vector<1x128xf32>
    %cst_10 = arith.constant 0.013888889 : f32
    %19 = vector.broadcast %cst_10 : f32 to vector<1x128xf32>
    %20 = arith.mulf %16, %19 : vector<1x128xf32>
    %21 = arith.mulf %18, %18 : vector<1x128xf32>
    %22 = arith.subf %20, %21 : vector<1x128xf32>
    %cst_11 = arith.constant 0.000000e+00 : f32
    %23 = vector.broadcast %cst_11 : f32 to vector<1x128xf32>
    %24 = arith.maximumf %22, %23 : vector<1x128xf32>
    %25 = vector.broadcast %18 : vector<1x128xf32> to vector<72x128xf32>
    %26 = arith.subf %10, %25 : vector<72x128xf32>
    %cst_12 = arith.constant 9.99999974E-6 : f32
    %27 = vector.broadcast %cst_12 : f32 to vector<1x128xf32>
    %28 = arith.addf %24, %27 : vector<1x128xf32>
    %29 = math.rsqrt %28 : vector<1x128xf32>
    %30 = vector.broadcast %29 : vector<1x128xf32> to vector<72x128xf32>
    %31 = arith.mulf %26, %30 : vector<72x128xf32>
    %c0_13 = arith.constant 0 : index
    %c0_14 = arith.constant 0 : index
    %32 = vector.load %arg3[%c0_13, %c0_14] : memref<1x128xf32, #tpu.memory_space<vmem>>, vector<1x128xf32>
    %33 = vector.broadcast %32 : vector<1x128xf32> to vector<72x128xf32>
    %34 = arith.mulf %31, %33 : vector<72x128xf32>
    %c0_15 = arith.constant 0 : index
    %c0_16 = arith.constant 0 : index
    %35 = vector.load %arg4[%c0_15, %c0_16] : memref<1x128xf32, #tpu.memory_space<vmem>>, vector<1x128xf32>
    %36 = vector.broadcast %35 : vector<1x128xf32> to vector<72x128xf32>
    %37 = arith.addf %34, %36 : vector<72x128xf32>
    %c0_17 = arith.constant 0 : index
    %c0_18 = arith.constant 0 : index
    %38 = vector.load %arg8[%c0_17, %c0_18] : memref<72x128xf32, #tpu.memory_space<vmem>>, vector<72x128xf32>
    tpu.vector_store %arg8[%c0_17, %c0_18], %37 {strides = array<i32>} : memref<72x128xf32, #tpu.memory_space<vmem>>, vector<72x128xf32>,
    %39 = arith.truncf %37 : vector<72x128xf32> to vector<72x128xbf16>
    %c0_19 = arith.constant 0 : index
    %c0_20 = arith.constant 0 : index
    %40 = vector.load %arg5[%c0_19, %c0_20] : memref<128x128xbf16, #tpu.memory_space<vmem>>, vector<128x128xbf16>
    %cst_21 = arith.constant dense<0.000000e+00> : vector<72x128xf32>
    %41 = tpu.matmul %39, %40, %cst_21 {dimension_numbers = #tpu.dot_dimension_numbers<[1], [0], [0], [1], [0, 0, 1, 1], [], []>} : vector<72x128xbf16>, vector<128x128xbf16>, vector<72x128xf32> -> vector<72x128xf32>
    %c0_22 = arith.constant 0 : index
    %c0_23 = arith.constant 0 : index
    %42 = vector.load %arg9[%c0_22, %c0_23] : memref<72x128xf32, #tpu.memory_space<vmem>>, vector<72x128xf32>
    tpu.vector_store %arg9[%c0_22, %c0_23], %41 {strides = array<i32>} : memref<72x128xf32, #tpu.memory_space<vmem>>, vector<72x128xf32>,
    return
  }
  func.func @transform_0(%arg0: i32) -> (i32, i32) {
    %c0_i32 = arith.constant 0 : i32
    %c0_i32_0 = arith.constant 0 : i32
    %c0_i32_1 = arith.constant 0 : i32
    return %c0_i32, %c0_i32_0 : i32, i32
  }
  func.func @transform_1(%arg0: i32) -> (i32, i32) {
    %c0_i32 = arith.constant 0 : i32
    %c0_i32_0 = arith.constant 0 : i32
    %c0_i32_1 = arith.constant 0 : i32
    return %c0_i32, %c0_i32_0 : i32, i32
  }
  func.func @transform_2(%arg0: i32) -> (i32, i32) {
    %c0_i32 = arith.constant 0 : i32
    %c0_i32_0 = arith.constant 0 : i32
    %c0_i32_1 = arith.constant 0 : i32
    return %c0_i32, %c0_i32_0 : i32, i32
  }
  func.func @transform_3(%arg0: i32) -> (i32, i32) {
    %c0_i32 = arith.constant 0 : i32
    %c0_i32_0 = arith.constant 0 : i32
    %c0_i32_1 = arith.constant 0 : i32
    return %c0_i32, %c0_i32_0 : i32, i32
  }
  func.func @transform_4(%arg0: i32) -> (i32, i32) {
    %c0_i32 = arith.constant 0 : i32
    %c0_i32_0 = arith.constant 0 : i32
    %c0_i32_1 = arith.constant 0 : i32
    return %c0_i32, %c0_i32_0 : i32, i32
  }
  func.func @transform_5(%arg0: i32) -> (i32, i32) {
    %c0_i32 = arith.constant 0 : i32
    %c0_i32_0 = arith.constant 0 : i32
    %c0_i32_1 = arith.constant 0 : i32
    return %c0_i32, %c0_i32_0 : i32, i32
  }
  func.func @transform_6(%arg0: i32) -> (i32, i32) {
    %c0_i32 = arith.constant 0 : i32
    %c0_i32_0 = arith.constant 0 : i32
    %c0_i32_1 = arith.constant 0 : i32
    return %c0_i32, %c0_i32_0 : i32, i32
  }
  func.func @transform_7(%arg0: i32) -> (i32, i32) {
    %c0_i32 = arith.constant 0 : i32
    %c0_i32_0 = arith.constant 0 : i32
    %c0_i32_1 = arith.constant 0 : i32
    return %c0_i32, %c0_i32_0 : i32, i32
  }
  func.func @transform_8(%arg0: i32) -> (i32, i32) {
    %c0_i32 = arith.constant 0 : i32
    %c0_i32_0 = arith.constant 0 : i32
    %c0_i32_1 = arith.constant 0 : i32
    return %c0_i32, %c0_i32_0 : i32, i32
  }
}

</mosaic_0001>

<llo_original>
// kernel: model_forward.1
$region0: #{model_forward.1}
  #allocation0 [shape = 'u32[]', space=smem, size = 0x4, offset = 0x4, fixed_abs, tag = 'smem constant byte address 0x4 - core index']
  #allocation1 [shape = 'u32[144,128]{1,0:T(1,128)}', space=vmem, size = 0x12000, scoped, tag = 'internal scratch']
  %s0 = inlined_call_operand.vmem [shape: bf16[288,128], index: 0, kind: input, shape index: {}]
  %s1 = inlined_call_operand.vmem [shape: bf16[128,128], index: 1, kind: input, shape index: {}]
  %s2 = inlined_call_operand.vmem [shape: f32[1,128], index: 2, kind: input, shape index: {}]
  %s3 = inlined_call_operand.vmem [shape: f32[1,128], index: 3, kind: input, shape index: {}]
  %s4 = inlined_call_operand.vmem [shape: bf16[128,128], index: 4, kind: input, shape index: {}]
  %s5 = inlined_call_operand.vmem [shape: f32[288,128], index: 5, kind: output, shape index: {0}]
  %s6 = inlined_call_operand.vmem [shape: f32[72,128], index: 6, kind: output, shape index: {1}]
  %s7 = inlined_call_operand.vmem [shape: f32[72,128], index: 7, kind: output, shape index: {2}]
  %s8 = inlined_call_operand.vmem [shape: f32[72,128], index: 8, kind: output, shape index: {3}]
  %9 = xla_tuple %s5, %s6, %s7, %s8
  %s10 = sld [smem:[#allocation0]]
  $region54: #{model_forward.1} parent=0
    _
  %s12 = ssub.s32 1, %s10
  %s13 = scalar_select 0, %s12, %s10
  // Predicated region
  $region2: #{model_forward.1} parent=0 // pred_check
    _
  $region3: #{model_forward.1} parent=0 // pred_check_branch
    %15 = sbr.rel (0) target = $region5
  $region4: #{model_forward.1} parent=0 // pred_region
    _
  $region5: #{model_forward.1} parent=0 // pred_fallthru
    _
  // Predicated region
  $region6: #{model_forward.1} parent=0 // pred_check
    _
  $region7: #{model_forward.1} parent=0 // pred_check_branch
    %17 = sbr.rel (0) target = $region9
  $region8: #{model_forward.1} parent=0 // pred_region
    _
  $region9: #{model_forward.1} parent=0 // pred_fallthru
    _
  // Predicated region
  $region10: #{model_forward.1} parent=0 // pred_check
    _
  $region11: #{model_forward.1} parent=0 // pred_check_branch
    %19 = sbr.rel (0) target = $region13
  $region12: #{model_forward.1} parent=0 // pred_region
    _
  $region13: #{model_forward.1} parent=0 // pred_fallthru
    _
  // Predicated region
  $region14: #{model_forward.1} parent=0 // pred_check
    _
  $region15: #{model_forward.1} parent=0 // pred_check_branch
    %21 = sbr.rel (0) target = $region17
  $region16: #{model_forward.1} parent=0 // pred_region
    _
  $region17: #{model_forward.1} parent=0 // pred_fallthru
    _
  // Predicated region
  $region18: #{model_forward.1} parent=0 // pred_check
    _
  $region19: #{model_forward.1} parent=0 // pred_check_branch
    %23 = sbr.rel (0) target = $region21
  $region20: #{model_forward.1} parent=0 // pred_region
    _
  $region21: #{model_forward.1} parent=0 // pred_fallthru
    _
  %v25 = vld [vmem:[%s0] sm:$0xf]
  %v26 = vld [vmem:[%s0 + $0x4] sm:$0xf]
  %v27 = vld [vmem:[%s0 + $0x8] sm:$0xf]
  %v28 = vld [vmem:[%s0 + $0xc] sm:$0xf]
  %v29 = vld [vmem:[%s0 + $0x10] sm:$0xf]
  %v30 = vld [vmem:[%s0 + $0x14] sm:$0xf]
  %v31 = vld [vmem:[%s0 + $0x18] sm:$0xf]
  %v32 = vld [vmem:[%s0 + $0x1c] sm:$0xf]
  %v33 = vld [vmem:[%s0 + $0x20] sm:$0xf]
  %v34 = vld [vmem:[%s0 + $0x24] sm:$0xf]
  %v35 = vld [vmem:[%s0 + $0x28] sm:$0xf]
  %v36 = vld [vmem:[%s0 + $0x2c] sm:$0xf]
  %v37 = vld [vmem:[%s0 + $0x30] sm:$0xf]
  %v38 = vld [vmem:[%s0 + $0x34] sm:$0xf]
  %v39 = vld [vmem:[%s0 + $0x38] sm:$0xf]
  %v40 = vld [vmem:[%s0 + $0x3c] sm:$0xf]
  %v41 = vld [vmem:[%s0 + $0x40] sm:$0xf]
  %v42 = vld [vmem:[%s0 + $0x44] sm:$0xf]
  %v43 = vld [vmem:[%s0 + $0x48] sm:$0xf]
  %v44 = vld [vmem:[%s0 + $0x4c] sm:$0xf]
  %v45 = vld [vmem:[%s0 + $0x50] sm:$0xf]
  %v46 = vld [vmem:[%s0 + $0x54] sm:$0xf]
  %v47 = vld [vmem:[%s0 + $0x58] sm:$0xf]
  %v48 = vld [vmem:[%s0 + $0x5c] sm:$0xf]
  %v49 = vld [vmem:[%s0 + $0x60] sm:$0xf]
  %v50 = vld [vmem:[%s0 + $0x64] sm:$0xf]
  %v51 = vld [vmem:[%s0 + $0x68] sm:$0xf]
  %v52 = vld [vmem:[%s0 + $0x6c] sm:$0xf]
  %v53 = vld [vmem:[%s0 + $0x70] sm:$0xf]
  %v54 = vld [vmem:[%s0 + $0x74] sm:$0xf]
  %v55 = vld [vmem:[%s0 + $0x78] sm:$0xf]
  %v56 = vld [vmem:[%s0 + $0x7c] sm:$0xf]
  %v57 = vld [vmem:[%s0 + $0x80] sm:$0xf]
  %v58 = vld [vmem:[%s0 + $0x84] sm:$0xf]
  %v59 = vld [vmem:[%s0 + $0x88] sm:$0xf]
  %v60 = vld [vmem:[%s0 + $0x8c] sm:$0xf]
  %v61 = vld [vmem:[%s1] sm:$0xf]
  %v62 = vld [vmem:[%s1 + $0x4] sm:$0xf]
  %v63 = vld [vmem:[%s1 + $0x8] sm:$0xf]
  %v64 = vld [vmem:[%s1 + $0xc] sm:$0xf]
  %v65 = vld [vmem:[%s1 + $0x10] sm:$0xf]
  %v66 = vld [vmem:[%s1 + $0x14] sm:$0xf]
  %v67 = vld [vmem:[%s1 + $0x18] sm:$0xf]
  %v68 = vld [vmem:[%s1 + $0x1c] sm:$0xf]
  %v69 = vld [vmem:[%s1 + $0x20] sm:$0xf]
  %v70 = vld [vmem:[%s1 + $0x24] sm:$0xf]
  %v71 = vld [vmem:[%s1 + $0x28] sm:$0xf]
  %v72 = vld [vmem:[%s1 + $0x2c] sm:$0xf]
  %v73 = vld [vmem:[%s1 + $0x30] sm:$0xf]
  %v74 = vld [vmem:[%s1 + $0x34] sm:$0xf]
  %v75 = vld [vmem:[%s1 + $0x38] sm:$0xf]
  %v76 = vld [vmem:[%s1 + $0x3c] sm:$0xf]
  %v113 = vunpack.c.l.b16 %v25
  %v114 = vunpack.c.l.b16 %v26
  %v115 = vunpack.c.l.b16 %v27
  %v116 = vunpack.c.l.b16 %v28
  %v117 = vunpack.c.l.b16 %v29
  %v118 = vunpack.c.l.b16 %v30
  %v119 = vunpack.c.l.b16 %v31
  %v120 = vunpack.c.l.b16 %v32
  %v121 = vunpack.c.l.b16 %v33
  %v122 = vunpack.c.l.b16 %v34
  %v123 = vunpack.c.l.b16 %v35
  %v124 = vunpack.c.l.b16 %v36
  %v125 = vunpack.c.l.b16 %v37
  %v126 = vunpack.c.l.b16 %v38
  %v127 = vunpack.c.l.b16 %v39
  %v128 = vunpack.c.l.b16 %v40
  %v129 = vunpack.c.l.b16 %v41
  %v130 = vunpack.c.l.b16 %v42
  %v131 = vunpack.c.l.b16 %v43
  %v132 = vunpack.c.l.b16 %v44
  %v133 = vunpack.c.l.b16 %v45
  %v134 = vunpack.c.l.b16 %v46
  %v135 = vunpack.c.l.b16 %v47
  %v136 = vunpack.c.l.b16 %v48
  %v137 = vunpack.c.l.b16 %v49
  %v138 = vunpack.c.l.b16 %v50
  %v139 = vunpack.c.l.b16 %v51
  %v140 = vunpack.c.l.b16 %v52
  %v141 = vunpack.c.l.b16 %v53
  %v142 = vunpack.c.l.b16 %v54
  %v143 = vunpack.c.l.b16 %v55
  %v144 = vunpack.c.l.b16 %v56
  %v145 = vunpack.c.l.b16 %v57
  %v146 = vunpack.c.l.b16 %v58
  %v147 = vunpack.c.l.b16 %v59
  %v148 = vunpack.c.l.b16 %v60
  %v149 = vpack.c.b16 %v114, %v113
  %v150 = vpack.c.b16 %v116, %v115
  %v151 = vpack.c.b16 %v118, %v117
  %v152 = vpack.c.b16 %v120, %v119
  %v153 = vpack.c.b16 %v122, %v121
  %v154 = vpack.c.b16 %v124, %v123
  %v155 = vpack.c.b16 %v126, %v125
  %v156 = vpack.c.b16 %v128, %v127
  %v157 = vpack.c.b16 %v130, %v129
  %v158 = vpack.c.b16 %v132, %v131
  %v159 = vpack.c.b16 %v134, %v133
  %v160 = vpack.c.b16 %v136, %v135
  %v161 = vpack.c.b16 %v138, %v137
  %v162 = vpack.c.b16 %v140, %v139
  %v163 = vpack.c.b16 %v142, %v141
  %v164 = vpack.c.b16 %v144, %v143
  %v165 = vpack.c.b16 %v146, %v145
  %v166 = vpack.c.b16 %v148, %v147
  %v201 = vunpack.c.l.b16 %v61
  %v202 = vunpack.c.l.b16 %v62
  %v203 = vunpack.c.l.b16 %v63
  %v204 = vunpack.c.l.b16 %v64
  %v205 = vunpack.c.l.b16 %v65
  %v206 = vunpack.c.l.b16 %v66
  %v207 = vunpack.c.l.b16 %v67
  %v208 = vunpack.c.l.b16 %v68
  %v209 = vunpack.c.l.b16 %v69
  %v210 = vunpack.c.l.b16 %v70
  %v211 = vunpack.c.l.b16 %v71
  %v212 = vunpack.c.l.b16 %v72
  %v213 = vunpack.c.l.b16 %v73
  %v214 = vunpack.c.l.b16 %v74
  %v215 = vunpack.c.l.b16 %v75
  %v216 = vunpack.c.l.b16 %v76
  %v217 = vpack.c.b16 %v202, %v201
  %v218 = vpack.c.b16 %v204, %v203
  %v219 = vpack.c.b16 %v206, %v205
  %v220 = vpack.c.b16 %v208, %v207
  %v221 = vpack.c.b16 %v210, %v209
  %v222 = vpack.c.b16 %v212, %v211
  %v223 = vpack.c.b16 %v214, %v213
  %v224 = vpack.c.b16 %v216, %v215
  %233 = vmatprep.subr.bf16.mxu0 0
  %234 = vmatpush1.bf16.msra.mxu0 %v224
  %235 = vmatprep.subr.bf16.mxu0 0
  %236 = vmatpush1.bf16.msra.mxu0 %v223
  %237 = vmatprep.subr.bf16.mxu0 0
  %238 = vmatpush1.bf16.msra.mxu0 %v222
  %239 = vmatprep.subr.bf16.mxu0 0
  %240 = vmatpush1.bf16.msra.mxu0 %v221
  %241 = vmatprep.subr.bf16.mxu0 0
  %242 = vmatpush1.bf16.msra.mxu0 %v220
  %243 = vmatprep.subr.bf16.mxu0 0
  %244 = vmatpush1.bf16.msra.mxu0 %v219
  %245 = vmatprep.subr.bf16.mxu0 0
  %246 = vmatpush1.bf16.msra.mxu0 %v218
  %247 = vmatprep.subr.bf16.mxu0 0
  %248 = vmatpush1.bf16.msra.mxu0 %v217
  %249 = vmatprep.subr.bf16.mxu0 0
  %250 = vmatpush2.bf16.msra.mxu0 0
  %251 = vmatprep.subr.bf16.mxu0 0
  %252 = vmatpush2.bf16.msra.mxu0 0
  %253 = vmatprep.subr.bf16.mxu0 0
  %254 = vmatpush2.bf16.msra.mxu0 0
  %255 = vmatprep.subr.bf16.mxu0 0
  %256 = vmatpush2.bf16.msra.mxu0 0
  %257 = vmatprep.subr.bf16.mxu0 0
  %258 = vmatpush2.bf16.msra.mxu0 0
  %259 = vmatprep.subr.bf16.mxu0 0
  %260 = vmatpush2.bf16.msra.mxu0 0
  %261 = vmatprep.subr.bf16.mxu0 0
  %262 = vmatpush2.bf16.msra.mxu0 0
  %263 = vmatprep.subr.bf16.mxu0 0
  %264 = vmatpush2.bf16.msra.mxu0 0
  %265 = vmatprep.mubr.bf16.mxu0 0
  %266 = vmatmul.mubr.bf16.gmra.mxu0 %v149
  %v267 = vpop.f32.mrf.mxu0
  %v268 = vadd.f32 0.0, %v267
  %v269 = vpop.f32.mrf.mxu0
  %v270 = vpop.f32.mrf.mxu0
  %v271 = vadd.f32 0.0, %v270
  %v272 = vpop.f32.mrf.mxu0
  %273 = vmatprep.mubr.bf16.mxu0 0
  %274 = vmatmul.mubr.bf16.gmra.mxu0 %v150
  %v275 = vpop.f32.mrf.mxu0
  %v276 = vadd.f32 0.0, %v275
  %v277 = vpop.f32.mrf.mxu0
  %v278 = vpop.f32.mrf.mxu0
  %v279 = vadd.f32 0.0, %v278
  %v280 = vpop.f32.mrf.mxu0
  %281 = vmatprep.mubr.bf16.mxu0 0
  %282 = vmatmul.mubr.bf16.gmra.mxu0 %v151
  %v283 = vpop.f32.mrf.mxu0
  %v284 = vadd.f32 0.0, %v283
  %v285 = vpop.f32.mrf.mxu0
  %v286 = vpop.f32.mrf.mxu0
  %v287 = vadd.f32 0.0, %v286
  %v288 = vpop.f32.mrf.mxu0
  %289 = vmatprep.mubr.bf16.mxu0 0
  %290 = vmatmul.mubr.bf16.gmra.mxu0 %v152
  %v291 = vpop.f32.mrf.mxu0
  %v292 = vadd.f32 0.0, %v291
  %v293 = vpop.f32.mrf.mxu0
  %v294 = vpop.f32.mrf.mxu0
  %v295 = vadd.f32 0.0, %v294
  %v296 = vpop.f32.mrf.mxu0
  %297 = vmatprep.mubr.bf16.mxu0 0
  %298 = vmatmul.mubr.bf16.gmra.mxu0 %v153
  %v299 = vpop.f32.mrf.mxu0
  %v300 = vadd.f32 0.0, %v299
  %v301 = vpop.f32.mrf.mxu0
  %v302 = vpop.f32.mrf.mxu0
  %v303 = vadd.f32 0.0, %v302
  %v304 = vpop.f32.mrf.mxu0
  %305 = vmatprep.mubr.bf16.mxu0 0
  %306 = vmatmul.mubr.bf16.gmra.mxu0 %v154
  %v307 = vpop.f32.mrf.mxu0
  %v308 = vadd.f32 0.0, %v307
  %v309 = vpop.f32.mrf.mxu0
  %v310 = vpop.f32.mrf.mxu0
  %v311 = vadd.f32 0.0, %v310
  %v312 = vpop.f32.mrf.mxu0
  %313 = vmatprep.mubr.bf16.mxu0 0
  %314 = vmatmul.mubr.bf16.gmra.mxu0 %v155
  %v315 = vpop.f32.mrf.mxu0
  %v316 = vadd.f32 0.0, %v315
  %v317 = vpop.f32.mrf.mxu0
  %v318 = vpop.f32.mrf.mxu0
  %v319 = vadd.f32 0.0, %v318
  %v320 = vpop.f32.mrf.mxu0
  %321 = vmatprep.mubr.bf16.mxu0 0
  %322 = vmatmul.mubr.bf16.gmra.mxu0 %v156
  %v323 = vpop.f32.mrf.mxu0
  %v324 = vadd.f32 0.0, %v323
  %v325 = vpop.f32.mrf.mxu0
  %v326 = vpop.f32.mrf.mxu0
  %v327 = vadd.f32 0.0, %v326
  %v328 = vpop.f32.mrf.mxu0
  %329 = vmatprep.mubr.bf16.mxu0 0
  %330 = vmatmul.mubr.bf16.gmra.mxu0 %v157
  %v331 = vpop.f32.mrf.mxu0
  %v332 = vadd.f32 0.0, %v331
  %v333 = vpop.f32.mrf.mxu0
  %v334 = vpop.f32.mrf.mxu0
  %v335 = vadd.f32 0.0, %v334
  %v336 = vpop.f32.mrf.mxu0
  %337 = vmatprep.mubr.bf16.mxu0 0
  %338 = vmatmul.mubr.bf16.gmra.mxu0 %v158
  %v339 = vpop.f32.mrf.mxu0
  %v340 = vadd.f32 0.0, %v339
  %v341 = vpop.f32.mrf.mxu0
  %v342 = vpop.f32.mrf.mxu0
  %v343 = vadd.f32 0.0, %v342
  %v344 = vpop.f32.mrf.mxu0
  %345 = vmatprep.mubr.bf16.mxu0 0
  %346 = vmatmul.mubr.bf16.gmra.mxu0 %v159
  %v347 = vpop.f32.mrf.mxu0
  %v348 = vadd.f32 0.0, %v347
  %v349 = vpop.f32.mrf.mxu0
  %v350 = vpop.f32.mrf.mxu0
  %v351 = vadd.f32 0.0, %v350
  %v352 = vpop.f32.mrf.mxu0
  %353 = vmatprep.mubr.bf16.mxu0 0
  %354 = vmatmul.mubr.bf16.gmra.mxu0 %v160
  %v355 = vpop.f32.mrf.mxu0
  %v356 = vadd.f32 0.0, %v355
  %v357 = vpop.f32.mrf.mxu0
  %v358 = vpop.f32.mrf.mxu0
  %v359 = vadd.f32 0.0, %v358
  %v360 = vpop.f32.mrf.mxu0
  %361 = vmatprep.mubr.bf16.mxu0 0
  %362 = vmatmul.mubr.bf16.gmra.mxu0 %v161
  %v363 = vpop.f32.mrf.mxu0
  %v364 = vadd.f32 0.0, %v363
  %v365 = vpop.f32.mrf.mxu0
  %v366 = vpop.f32.mrf.mxu0
  %v367 = vadd.f32 0.0, %v366
  %v368 = vpop.f32.mrf.mxu0
  %369 = vmatprep.mubr.bf16.mxu0 0
  %370 = vmatmul.mubr.bf16.gmra.mxu0 %v162
  %v371 = vpop.f32.mrf.mxu0
  %v372 = vadd.f32 0.0, %v371
  %v373 = vpop.f32.mrf.mxu0
  %v374 = vpop.f32.mrf.mxu0
  %v375 = vadd.f32 0.0, %v374
  %v376 = vpop.f32.mrf.mxu0
  %377 = vmatprep.mubr.bf16.mxu0 0
  %378 = vmatmul.mubr.bf16.gmra.mxu0 %v163
  %v379 = vpop.f32.mrf.mxu0
  %v380 = vadd.f32 0.0, %v379
  %v381 = vpop.f32.mrf.mxu0
  %v382 = vpop.f32.mrf.mxu0
  %v383 = vadd.f32 0.0, %v382
  %v384 = vpop.f32.mrf.mxu0
  %385 = vmatprep.mubr.bf16.mxu0 0
  %386 = vmatmul.mubr.bf16.gmra.mxu0 %v164
  %v387 = vpop.f32.mrf.mxu0
  %v388 = vadd.f32 0.0, %v387
  %v389 = vpop.f32.mrf.mxu0
  %v390 = vpop.f32.mrf.mxu0
  %v391 = vadd.f32 0.0, %v390
  %v392 = vpop.f32.mrf.mxu0
  %393 = vmatprep.mubr.bf16.mxu0 0
  %394 = vmatmul.mubr.bf16.gmra.mxu0 %v165
  %v395 = vpop.f32.mrf.mxu0
  %v396 = vadd.f32 0.0, %v395
  %v397 = vpop.f32.mrf.mxu0
  %v398 = vpop.f32.mrf.mxu0
  %v399 = vadd.f32 0.0, %v398
  %v400 = vpop.f32.mrf.mxu0
  %401 = vmatprep.mubr.bf16.mxu0 0
  %402 = vmatmul.mubr.bf16.gmra.mxu0 %v166
  %v403 = vpop.f32.mrf.mxu0
  %v404 = vadd.f32 0.0, %v403
  %v405 = vpop.f32.mrf.mxu0
  %v406 = vpop.f32.mrf.mxu0
  %v407 = vadd.f32 0.0, %v406
  %v408 = vpop.f32.mrf.mxu0
  %409 = vdwg.mxu0
  %410 = vst [vmem:[%s5] sm:$0xff] %v268
  %411 = vst [vmem:[%s5 + $0x8] sm:$0xff] %v271
  %412 = vst [vmem:[%s5 + $0x10] sm:$0xff] %v276
  %413 = vst [vmem:[%s5 + $0x18] sm:$0xff] %v279
  %414 = vst [vmem:[%s5 + $0x20] sm:$0xff] %v284
  %415 = vst [vmem:[%s5 + $0x28] sm:$0xff] %v287
  %416 = vst [vmem:[%s5 + $0x30] sm:$0xff] %v292
  %417 = vst [vmem:[%s5 + $0x38] sm:$0xff] %v295
  %418 = vst [vmem:[%s5 + $0x40] sm:$0xff] %v300
  %419 = vst [vmem:[%s5 + $0x48] sm:$0xff] %v303
  %420 = vst [vmem:[%s5 + $0x50] sm:$0xff] %v308
  %421 = vst [vmem:[%s5 + $0x58] sm:$0xff] %v311
  %422 = vst [vmem:[%s5 + $0x60] sm:$0xff] %v316
  %423 = vst [vmem:[%s5 + $0x68] sm:$0xff] %v319
  %424 = vst [vmem:[%s5 + $0x70] sm:$0xff] %v324
  %425 = vst [vmem:[%s5 + $0x78] sm:$0xff] %v327
  %426 = vst [vmem:[%s5 + $0x80] sm:$0xff] %v332
  %427 = vst [vmem:[%s5 + $0x88] sm:$0xff] %v335
  %428 = vst [vmem:[%s5 + $0x90] sm:$0xff] %v340
  %429 = vst [vmem:[%s5 + $0x98] sm:$0xff] %v343
  %430 = vst [vmem:[%s5 + $0xa0] sm:$0xff] %v348
  %431 = vst [vmem:[%s5 + $0xa8] sm:$0xff] %v351
  %432 = vst [vmem:[%s5 + $0xb0] sm:$0xff] %v356
  %433 = vst [vmem:[%s5 + $0xb8] sm:$0xff] %v359
  %434 = vst [vmem:[%s5 + $0xc0] sm:$0xff] %v364
  %435 = vst [vmem:[%s5 + $0xc8] sm:$0xff] %v367
  %436 = vst [vmem:[%s5 + $0xd0] sm:$0xff] %v372
  %437 = vst [vmem:[%s5 + $0xd8] sm:$0xff] %v375
  %438 = vst [vmem:[%s5 + $0xe0] sm:$0xff] %v380
  %439 = vst [vmem:[%s5 + $0xe8] sm:$0xff] %v383
  %440 = vst [vmem:[%s5 + $0xf0] sm:$0xff] %v388
  %441 = vst [vmem:[%s5 + $0xf8] sm:$0xff] %v391
  %442 = vst [vmem:[%s5 + $0x100] sm:$0xff] %v396
  %443 = vst [vmem:[%s5 + $0x108] sm:$0xff] %v399
  %444 = vst [vmem:[%s5 + $0x110] sm:$0xff] %v404
  %445 = vst [vmem:[%s5 + $0x118] sm:$0xff] %v407
  %v446 = vmax.f32 %v268, %v303
  %v447 = vmax.f32 %v271, %v308
  %v448 = vmax.f32 %v276, %v311
  %v449 = vmax.f32 %v279, %v316
  %v450 = vmax.f32 %v284, %v319
  %v451 = vmax.f32 %v287, %v324
  %v452 = vmax.f32 %v292, %v327
  %v453 = vmax.f32 %v295, %v332
  %v454 = vmax.f32 %v300, %v335
  %v455 = vmax.f32 %v340, %v375
  %v456 = vmax.f32 %v343, %v380
  %v457 = vmax.f32 %v348, %v383
  %v458 = vmax.f32 %v351, %v388
  %v459 = vmax.f32 %v356, %v391
  %v460 = vmax.f32 %v359, %v396
  %v461 = vmax.f32 %v364, %v399
  %v462 = vmax.f32 %v367, %v404
  %v463 = vmax.f32 %v372, %v407
  %v464 = vmax.f32 %v446, %v455
  %v465 = vmax.f32 %v447, %v456
  %v466 = vmax.f32 %v448, %v457
  %v467 = vmax.f32 %v449, %v458
  %v468 = vmax.f32 %v450, %v459
  %v469 = vmax.f32 %v451, %v460
  %v470 = vmax.f32 %v452, %v461
  %v471 = vmax.f32 %v453, %v462
  %v472 = vmax.f32 %v454, %v463
  %473 = vst [vmem:[%s6] sm:$0xff] %v464
  %474 = vst [vmem:[%s6 + $0x8] sm:$0xff] %v465
  %475 = vst [vmem:[%s6 + $0x10] sm:$0xff] %v466
  %476 = vst [vmem:[%s6 + $0x18] sm:$0xff] %v467
  %477 = vst [vmem:[%s6 + $0x20] sm:$0xff] %v468
  %478 = vst [vmem:[%s6 + $0x28] sm:$0xff] %v469
  %479 = vst [vmem:[%s6 + $0x30] sm:$0xff] %v470
  %480 = vst [vmem:[%s6 + $0x38] sm:$0xff] %v471
  %481 = vst [vmem:[%s6 + $0x40] sm:$0xff] %v472
  %v482 = vadd.f32 %v464, %v465
  %v483 = vadd.f32 %v482, %v466
  %v484 = vadd.f32 %v483, %v467
  %v485 = vadd.f32 %v484, %v468
  %v486 = vadd.f32 %v485, %v469
  %v487 = vadd.f32 %v486, %v470
  %v488 = vadd.f32 %v487, %v471
  %v489 = vadd.f32 %v488, %v472
  %v490 = vrot.slane %v489, 4
  %v491 = vadd.f32 %v489, %v490
  %v492 = vrot.slane %v491, 2
  %v493 = vadd.f32 %v491, %v492
  %v494 = vrot.slane %v493, 1
  %v495 = vadd.f32 %v493, %v494
  %v496 = vmul.f32 %v464, %v464
  %v497 = vmul.f32 %v465, %v465
  %v498 = vmul.f32 %v466, %v466
  %v499 = vmul.f32 %v467, %v467
  %v500 = vmul.f32 %v468, %v468
  %v501 = vmul.f32 %v469, %v469
  %v502 = vmul.f32 %v470, %v470
  %v503 = vmul.f32 %v471, %v471
  %v504 = vmul.f32 %v472, %v472
  %v505 = vadd.f32 %v496, %v497
  %v506 = vadd.f32 %v505, %v498
  %v507 = vadd.f32 %v506, %v499
  %v508 = vadd.f32 %v507, %v500
  %v509 = vadd.f32 %v508, %v501
  %v510 = vadd.f32 %v509, %v502
  %v511 = vadd.f32 %v510, %v503
  %v512 = vadd.f32 %v511, %v504
  %v513 = vrot.slane %v512, 4
  %v514 = vadd.f32 %v512, %v513
  %v515 = vrot.slane %v514, 2
  %v516 = vadd.f32 %v514, %v515
  %v517 = vrot.slane %v516, 1
  %v518 = vadd.f32 %v516, %v517
  %v519 = vmul.f32 %v495, 0.013888889
  %v520 = vmul.f32 %v518, 0.013888889
  %v521 = vmul.f32 %v519, %v519
  %v522 = vsub.f32 %v520, %v521
  %v523 = vmax.f32 %v522, 0.0
  %v524 = vsub.f32 %v464, %v519
  %v525 = vsub.f32 %v465, %v519
  %v526 = vsub.f32 %v466, %v519
  %v527 = vsub.f32 %v467, %v519
  %v528 = vsub.f32 %v468, %v519
  %v529 = vsub.f32 %v469, %v519
  %v530 = vsub.f32 %v470, %v519
  %v531 = vsub.f32 %v471, %v519
  %v532 = vsub.f32 %v472, %v519
  %v533 = vadd.f32 %v523, 1e-05
  %v534 = vrsqrt.pop %v533
  %v535 = vmul.f32 %v524, %v534
  %v536 = vmul.f32 %v525, %v534
  %v537 = vmul.f32 %v526, %v534
  %v538 = vmul.f32 %v527, %v534
  %v539 = vmul.f32 %v528, %v534
  %v540 = vmul.f32 %v529, %v534
  %v541 = vmul.f32 %v530, %v534
  %v542 = vmul.f32 %v531, %v534
  %v543 = vmul.f32 %v532, %v534
  %v544 = vld [vmem:[%s2] sm:$0x1]
  %v546 = vlaneseq
  %v547 = vshrl.u32 %v546, 7
  %v548 = vsub.s32 0, %v547
  %v549 = vrot.slane %v544, %v548
  %v551 = vmul.f32 %v535, %v549
  %v552 = vmul.f32 %v536, %v549
  %v553 = vmul.f32 %v537, %v549
  %v554 = vmul.f32 %v538, %v549
  %v555 = vmul.f32 %v539, %v549
  %v556 = vmul.f32 %v540, %v549
  %v557 = vmul.f32 %v541, %v549
  %v558 = vmul.f32 %v542, %v549
  %v559 = vmul.f32 %v543, %v549
  %v560 = vld [vmem:[%s3] sm:$0x1]
  %v562 = vlaneseq
  %v563 = vshrl.u32 %v562, 7
  %v564 = vsub.s32 0, %v563
  %v565 = vrot.slane %v560, %v564
  %v567 = vadd.f32 %v551, %v565
  %v568 = vadd.f32 %v552, %v565
  %v569 = vadd.f32 %v553, %v565
  %v570 = vadd.f32 %v554, %v565
  %v571 = vadd.f32 %v555, %v565
  %v572 = vadd.f32 %v556, %v565
  %v573 = vadd.f32 %v557, %v565
  %v574 = vadd.f32 %v558, %v565
  %v575 = vadd.f32 %v559, %v565
  %576 = vst [vmem:[%s7] sm:$0xff] %v567
  %577 = vst [vmem:[%s7 + $0x8] sm:$0xff] %v568
  %578 = vst [vmem:[%s7 + $0x10] sm:$0xff] %v569
  %579 = vst [vmem:[%s7 + $0x18] sm:$0xff] %v570
  %580 = vst [vmem:[%s7 + $0x20] sm:$0xff] %v571
  %581 = vst [vmem:[%s7 + $0x28] sm:$0xff] %v572
  %582 = vst [vmem:[%s7 + $0x30] sm:$0xff] %v573
  %583 = vst [vmem:[%s7 + $0x38] sm:$0xff] %v574
  %584 = vst [vmem:[%s7 + $0x40] sm:$0xff] %v575
  %v585 = vpack.c.bf16 %v568, %v567
  %v586 = vpack.c.bf16 %v570, %v569
  %v587 = vpack.c.bf16 %v572, %v571
  %v588 = vpack.c.bf16 %v574, %v573
  %v589 = vpack.c.bf16 %v575, %v575
  %v590 = vld [vmem:[%s4] sm:$0xf]
  %v591 = vld [vmem:[%s4 + $0x4] sm:$0xf]
  %v592 = vld [vmem:[%s4 + $0x8] sm:$0xf]
  %v593 = vld [vmem:[%s4 + $0xc] sm:$0xf]
  %v594 = vld [vmem:[%s4 + $0x10] sm:$0xf]
  %v595 = vld [vmem:[%s4 + $0x14] sm:$0xf]
  %v596 = vld [vmem:[%s4 + $0x18] sm:$0xf]
  %v597 = vld [vmem:[%s4 + $0x1c] sm:$0xf]
  %v598 = vld [vmem:[%s4 + $0x20] sm:$0xf]
  %v599 = vld [vmem:[%s4 + $0x24] sm:$0xf]
  %v600 = vld [vmem:[%s4 + $0x28] sm:$0xf]
  %v601 = vld [vmem:[%s4 + $0x2c] sm:$0xf]
  %v602 = vld [vmem:[%s4 + $0x30] sm:$0xf]
  %v603 = vld [vmem:[%s4 + $0x34] sm:$0xf]
  %v604 = vld [vmem:[%s4 + $0x38] sm:$0xf]
  %v605 = vld [vmem:[%s4 + $0x3c] sm:$0xf]
  %v622 = vunpack.c.l.b16 %v590
  %v623 = vunpack.c.l.b16 %v591
  %v624 = vunpack.c.l.b16 %v592
  %v625 = vunpack.c.l.b16 %v593
  %v626 = vunpack.c.l.b16 %v594
  %v627 = vunpack.c.l.b16 %v595
  %v628 = vunpack.c.l.b16 %v596
  %v629 = vunpack.c.l.b16 %v597
  %v630 = vunpack.c.l.b16 %v598
  %v631 = vunpack.c.l.b16 %v599
  %v632 = vunpack.c.l.b16 %v600
  %v633 = vunpack.c.l.b16 %v601
  %v634 = vunpack.c.l.b16 %v602
  %v635 = vunpack.c.l.b16 %v603
  %v636 = vunpack.c.l.b16 %v604
  %v637 = vunpack.c.l.b16 %v605
  %v638 = vpack.c.b16 %v623, %v622
  %v639 = vpack.c.b16 %v625, %v624
  %v640 = vpack.c.b16 %v627, %v626
  %v641 = vpack.c.b16 %v629, %v628
  %v642 = vpack.c.b16 %v631, %v630
  %v643 = vpack.c.b16 %v633, %v632
  %v644 = vpack.c.b16 %v635, %v634
  %v645 = vpack.c.b16 %v637, %v636
  %654 = vmatprep.subr.bf16.mxu0 0
  %655 = vmatpush1.bf16.msra.mxu0 %v645
  %656 = vmatprep.subr.bf16.mxu0 0
  %657 = vmatpush1.bf16.msra.mxu0 %v644
  %658 = vmatprep.subr.bf16.mxu0 0
  %659 = vmatpush1.bf16.msra.mxu0 %v643
  %660 = vmatprep.subr.bf16.mxu0 0
  %661 = vmatpush1.bf16.msra.mxu0 %v642
  %662 = vmatprep.subr.bf16.mxu0 0
  %663 = vmatpush1.bf16.msra.mxu0 %v641
  %664 = vmatprep.subr.bf16.mxu0 0
  %665 = vmatpush1.bf16.msra.mxu0 %v640
  %666 = vmatprep.subr.bf16.mxu0 0
  %667 = vmatpush1.bf16.msra.mxu0 %v639
  %668 = vmatprep.subr.bf16.mxu0 0
  %669 = vmatpush1.bf16.msra.mxu0 %v638
  %670 = vmatprep.subr.bf16.mxu0 0
  %671 = vmatpush2.bf16.msra.mxu0 0
  %672 = vmatprep.subr.bf16.mxu0 0
  %673 = vmatpush2.bf16.msra.mxu0 0
  %674 = vmatprep.subr.bf16.mxu0 0
  %675 = vmatpush2.bf16.msra.mxu0 0
  %676 = vmatprep.subr.bf16.mxu0 0
  %677 = vmatpush2.bf16.msra.mxu0 0
  %678 = vmatprep.subr.bf16.mxu0 0
  %679 = vmatpush2.bf16.msra.mxu0 0
  %680 = vmatprep.subr.bf16.mxu0 0
  %681 = vmatpush2.bf16.msra.mxu0 0
  %682 = vmatprep.subr.bf16.mxu0 0
  %683 = vmatpush2.bf16.msra.mxu0 0
  %684 = vmatprep.subr.bf16.mxu0 0
  %685 = vmatpush2.bf16.msra.mxu0 0
  %686 = vmatprep.mubr.bf16.mxu0 0
  %687 = vmatmul.mubr.bf16.gmra.mxu0 %v585
  %v688 = vpop.f32.mrf.mxu0
  %v689 = vadd.f32 0.0, %v688
  %v690 = vpop.f32.mrf.mxu0
  %v691 = vpop.f32.mrf.mxu0
  %v692 = vadd.f32 0.0, %v691
  %v693 = vpop.f32.mrf.mxu0
  %694 = vmatprep.mubr.bf16.mxu0 0
  %695 = vmatmul.mubr.bf16.gmra.mxu0 %v586
  %v696 = vpop.f32.mrf.mxu0
  %v697 = vadd.f32 0.0, %v696
  %v698 = vpop.f32.mrf.mxu0
  %v699 = vpop.f32.mrf.mxu0
  %v700 = vadd.f32 0.0, %v699
  %v701 = vpop.f32.mrf.mxu0
  %702 = vmatprep.mubr.bf16.mxu0 0
  %703 = vmatmul.mubr.bf16.gmra.mxu0 %v587
  %v704 = vpop.f32.mrf.mxu0
  %v705 = vadd.f32 0.0, %v704
  %v706 = vpop.f32.mrf.mxu0
  %v707 = vpop.f32.mrf.mxu0
  %v708 = vadd.f32 0.0, %v707
  %v709 = vpop.f32.mrf.mxu0
  %710 = vmatprep.mubr.bf16.mxu0 0
  %711 = vmatmul.mubr.bf16.gmra.mxu0 %v588
  %v712 = vpop.f32.mrf.mxu0
  %v713 = vadd.f32 0.0, %v712
  %v714 = vpop.f32.mrf.mxu0
  %v715 = vpop.f32.mrf.mxu0
  %v716 = vadd.f32 0.0, %v715
  %v717 = vpop.f32.mrf.mxu0
  %718 = vmatprep.mubr.bf16.mxu0 0
  %719 = vmatmul.mubr.bf16.gmra.mxu0 %v589
  %v720 = vpop.f32.mrf.mxu0
  %v721 = vadd.f32 0.0, %v720
  %v722 = vpop.f32.mrf.mxu0
  %v723 = vpop.f32.mrf.mxu0
  %v724 = vpop.f32.mrf.mxu0
  %725 = vdwg.mxu0
  %726 = vst [vmem:[%s8] sm:$0xff] %v689
  %727 = vst [vmem:[%s8 + $0x8] sm:$0xff] %v692
  %728 = vst [vmem:[%s8 + $0x10] sm:$0xff] %v697
  %729 = vst [vmem:[%s8 + $0x18] sm:$0xff] %v700
  %730 = vst [vmem:[%s8 + $0x20] sm:$0xff] %v705
  %731 = vst [vmem:[%s8 + $0x28] sm:$0xff] %v708
  %732 = vst [vmem:[%s8 + $0x30] sm:$0xff] %v713
  %733 = vst [vmem:[%s8 + $0x38] sm:$0xff] %v716
  %734 = vst [vmem:[%s8 + $0x40] sm:$0xff] %v721
  // Predicated region
  $region22: #{model_forward.1} parent=0 // pred_check
    _
  $region23: #{model_forward.1} parent=0 // pred_check_branch
    %736 = sbr.rel (0) target = $region25
  $region24: #{model_forward.1} parent=0 // pred_region
    _
  $region25: #{model_forward.1} parent=0 // pred_fallthru
    _
  // Predicated region
  $region26: #{model_forward.1} parent=0 // pred_check
    _
  $region27: #{model_forward.1} parent=0 // pred_check_branch
    %738 = sbr.rel (0) target = $region29
  $region28: #{model_forward.1} parent=0 // pred_region
    _
  $region29: #{model_forward.1} parent=0 // pred_fallthru
    _
  // Predicated region
  $region30: #{model_forward.1} parent=0 // pred_check
    _
  $region31: #{model_forward.1} parent=0 // pred_check_branch
    %740 = sbr.rel (0) target = $region33
  $region32: #{model_forward.1} parent=0 // pred_region
    _
  $region33: #{model_forward.1} parent=0 // pred_fallthru
    _
  // Predicated region
  $region34: #{model_forward.1} parent=0 // pred_check
    _
  $region35: #{model_forward.1} parent=0 // pred_check_branch
    %742 = sbr.rel (0) target = $region37
  $region36: #{model_forward.1} parent=0 // pred_region
    _
  $region37: #{model_forward.1} parent=0 // pred_fallthru
    _
  // Predicated region
  $region38: #{model_forward.1} parent=0 // pred_check
    _
  $region39: #{model_forward.1} parent=0 // pred_check_branch
    %744 = sbr.rel (0) target = $region41
  $region40: #{model_forward.1} parent=0 // pred_region
    _
  $region41: #{model_forward.1} parent=0 // pred_fallthru
    _
  // Predicated region
  $region42: #{model_forward.1} parent=0 // pred_check
    _
  $region43: #{model_forward.1} parent=0 // pred_check_branch
    %746 = sbr.rel (0) target = $region45
  $region44: #{model_forward.1} parent=0 // pred_region
    _
  $region45: #{model_forward.1} parent=0 // pred_fallthru
    _
  // Predicated region
  $region46: #{model_forward.1} parent=0 // pred_check
    _
  $region47: #{model_forward.1} parent=0 // pred_check_branch
    %748 = sbr.rel (0) target = $region49
  $region48: #{model_forward.1} parent=0 // pred_region
    _
  $region49: #{model_forward.1} parent=0 // pred_fallthru
    _
  // Predicated region
  $region50: #{model_forward.1} parent=0 // pred_check
    _
  $region51: #{model_forward.1} parent=0 // pred_check_branch
    %750 = sbr.rel (0) target = $region53
  $region52: #{model_forward.1} parent=0 // pred_region
    _
  $region53: #{model_forward.1} parent=0 // pred_fallthru
    _

</llo_original>
